<compile_context>
chip_gen: v7x
topology: tpu7x:2x2x1
jax: 0.10.0
libtpu: 0.0.40
codegen_flags: <defaults>
</compile_context>

<pallas_src>
import math
import numpy as np
import jax
import jax.numpy as jnp
from jax.experimental import pallas as pl
from jax.experimental.pallas import tpu as pltpu

# Small, module-consistent dims.
B = 2            # batch
L = 8            # sequence length
D_MODEL = 32     # d_model
MAX_LEN = 96     # max_len of the registered 'pe' buffer
DROPOUT_P = 0.1  # unused at inference (identity)


def positional_encoding_table(max_len: int, d_model: int) -> jnp.ndarray:
    """Sinusoid table identical to the PyTorch buffer (shape (max_len, d_model))."""
    pe = np.zeros((max_len, d_model), dtype=np.float64)
    position = np.arange(0, max_len, dtype=np.float64)[:, None]
    div_term = np.exp(np.arange(0, d_model, 2, dtype=np.float64)
                      * -(math.log(10000.0) / d_model))
    pe[:, 0::2] = np.sin(position * div_term)
    pe[:, 1::2] = np.cos(position * div_term)
    return jnp.asarray(pe, jnp.float32)


def _pe_add_kernel(x_ref, pe_ref, out_ref):
    # x_ref : (B, L*D) slab, pe_ref : (1, L*D) row  ->  broadcast add over batch rows.
    out_ref[...] = x_ref[...] + pe_ref[...]


def positional_encoding_forward(x: jnp.ndarray, pe_table: jnp.ndarray) -> jnp.ndarray:
    """x: (B, L, D_MODEL) float32.  Returns x + pe[:L] (dropout = identity, eval)."""
    b, l, d = x.shape
    flat = l * d

    # Lane-dense slabs (last dim = L*D, a multiple of 128 for these shapes).
    x_slab = x.reshape(b, flat)                       # (B, L*D)
    pe_row = pe_table[:l, :].reshape(1, flat)         # (1, L*D)

    out_slab = pl.pallas_call(
        _pe_add_kernel,
        out_shape=jax.ShapeDtypeStruct((b, flat), jnp.float32),
        grid=(1,),                                    # single step: whole batch at once
        in_specs=[
            pl.BlockSpec((b, flat), lambda i: (0, 0)),   # x slab
            pl.BlockSpec((1, flat), lambda i: (0, 0)),   # pe row (broadcast in kernel)
        ],
        out_specs=pl.BlockSpec((b, flat), lambda i: (0, 0)),
        compiler_params=pltpu.CompilerParams(dimension_semantics=("parallel",)),
    )(x_slab, pe_row)

    return out_slab.reshape(b, l, d)


if __name__ == "__main__":
    key = jax.random.PRNGKey(0)
    x = jax.random.normal(key, (B, L, D_MODEL), jnp.float32)

    pe_table = positional_encoding_table(MAX_LEN, D_MODEL)

    out = positional_encoding_forward(x, pe_table)
    jax.block_until_ready(out)

    # Reference check (plain JAX): x + pe[:, :L]
    ref = x + pe_table[None, :L, :]
    assert out.shape == (B, L, D_MODEL)
    np.testing.assert_allclose(np.asarray(out), np.asarray(ref), rtol=1e-6, atol=1e-6)

    print("KERNEL_OK")
</pallas_src>

<mosaic_0001>
module attributes {stable_mosaic.version = 11 : i64} {
  func.func @_pe_add_kernel(%arg0: i32, %arg1: memref<2x256xf32, #tpu.memory_space<vmem>>, %arg2: memref<1x256xf32, #tpu.memory_space<vmem>>, %arg3: memref<2x256xf32, #tpu.memory_space<vmem>>) attributes {dimension_semantics = [#tpu.dimension_semantics<parallel>], iteration_bounds = array<i64: 1>, scalar_prefetch = 0 : i64, scratch_operands = 0 : i64, tpu.core_type = #tpu.core_type<tc>, window_params = [{pipeline_mode = #tpu.pipeline_mode<synchronous>, transform_indices = @transform_0, window_bounds = array<i64: 2, 256>}, {pipeline_mode = #tpu.pipeline_mode<synchronous>, transform_indices = @transform_1, window_bounds = array<i64: 1, 256>}, {pipeline_mode = #tpu.pipeline_mode<synchronous>, transform_indices = @transform_2, window_bounds = array<i64: 2, 256>}]} {
    %c0 = arith.constant 0 : index
    %c0_0 = arith.constant 0 : index
    %0 = vector.load %arg1[%c0, %c0_0] : memref<2x256xf32, #tpu.memory_space<vmem>>, vector<2x256xf32>
    %c0_1 = arith.constant 0 : index
    %c0_2 = arith.constant 0 : index
    %1 = vector.load %arg2[%c0_1, %c0_2] : memref<1x256xf32, #tpu.memory_space<vmem>>, vector<1x256xf32>
    %2 = vector.broadcast %1 : vector<1x256xf32> to vector<2x256xf32>
    %3 = arith.addf %0, %2 : vector<2x256xf32>
    %c0_3 = arith.constant 0 : index
    %c0_4 = arith.constant 0 : index
    %4 = vector.load %arg3[%c0_3, %c0_4] : memref<2x256xf32, #tpu.memory_space<vmem>>, vector<2x256xf32>
    tpu.vector_store %arg3[%c0_3, %c0_4], %3 {strides = array<i32>} : memref<2x256xf32, #tpu.memory_space<vmem>>, vector<2x256xf32>,
    return
  }
  func.func @transform_0(%arg0: i32) -> (i32, i32) {
    %c0_i32 = arith.constant 0 : i32
    %c0_i32_0 = arith.constant 0 : i32
    %c0_i32_1 = arith.constant 0 : i32
    return %c0_i32, %c0_i32_0 : i32, i32
  }
  func.func @transform_1(%arg0: i32) -> (i32, i32) {
    %c0_i32 = arith.constant 0 : i32
    %c0_i32_0 = arith.constant 0 : i32
    %c0_i32_1 = arith.constant 0 : i32
    return %c0_i32, %c0_i32_0 : i32, i32
  }
  func.func @transform_2(%arg0: i32) -> (i32, i32) {
    %c0_i32 = arith.constant 0 : i32
    %c0_i32_0 = arith.constant 0 : i32
    %c0_i32_1 = arith.constant 0 : i32
    return %c0_i32, %c0_i32_0 : i32, i32
  }
}

</mosaic_0001>

<llo_original>
// kernel: tpu_custom_call.1
$region0: #{tpu_custom_call.1}
  #allocation0 [shape = 'u32[]', space=smem, size = 0x4, offset = 0x4, fixed_abs, tag = 'smem constant byte address 0x4 - core index']
  #allocation1 [shape = 'u32[144,128]{1,0:T(1,128)}', space=vmem, size = 0x12000, scoped, tag = 'internal scratch']
  %s0 = inlined_call_operand.hbm [shape: f32[2,256], index: 0, kind: input, shape index: {}]
  %s1 = inlined_call_operand.vmem [shape: f32[1,256], index: 1, kind: input, shape index: {}]
  %s2 = inlined_call_operand.hbm [shape: f32[2,256], index: 2, kind: output, shape index: {}]
  %s3 = sld [smem:[#allocation0]]
  $region22: #{tpu_custom_call.1} parent=0
    _
  %s5 = ssub.s32 1, %s3
  %s6 = scalar_select 0, %s5, %s3
  $region1: #{tpu_custom_call.1} parent=0
    #allocation2 [shape = 'u8[2048]{0}', space=vmem, size = 0x800, scoped, tag = 'input window, operand 0, single buffered']
    #allocation3 [shape = 's32[1]{0}', space=sflag, size = 0x4, scoped, tag = 'scoped memory for tpu_custom_call.1']
    #allocation4 [shape = 's32[1]{0}', space=sflag, size = 0x4, scoped, tag = 'scoped memory for tpu_custom_call.1']
    #allocation5 [shape = 'u8[2048]{0}', space=vmem, size = 0x800, scoped, tag = 'output window, operand 0, single buffered']
    %7 = vsyncpa [#allocation3], 0
    %8 = vsyncpa [#allocation4], 0
    // Predicated region
    $region2: #{tpu_custom_call.1} parent=1 // pred_check
      _
    $region3: #{tpu_custom_call.1} parent=1 // pred_check_branch
      %10 = sbr.rel (0) target = $region5
    $region4: #{tpu_custom_call.1} parent=1 // pred_region
      %s12 = ssub.s32 64, 64
      %13 = vsyncadd [#allocation3], %s12
      %s15 = sshll.u32 [#allocation2], 4
      %s16 = int_to_ptr.vmem [resolvable:$true] %s15
      %18 = dma.hbm_to_vmem [thread:$0]  %s0, 64, %s16, [#allocation3]
    $region5: #{tpu_custom_call.1} parent=1 // pred_fallthru
      _
    // Predicated region
    $region6: #{tpu_custom_call.1} parent=1 // pred_check
      _
    $region7: #{tpu_custom_call.1} parent=1 // pred_check_branch
      %20 = sbr.rel (0) target = $region9
    $region8: #{tpu_custom_call.1} parent=1 // pred_region
      _
    $region9: #{tpu_custom_call.1} parent=1 // pred_fallthru
      _
    // Predicated region
    $region10: #{tpu_custom_call.1} parent=1 // pred_check
      _
    $region11: #{tpu_custom_call.1} parent=1 // pred_check_branch
      %22 = sbr.rel (0) target = $region13
    $region12: #{tpu_custom_call.1} parent=1 // pred_region
      %23 = dma.done [#allocation3], 64
    $region13: #{tpu_custom_call.1} parent=1 // pred_fallthru
      _
    %v24 = vld [vmem:[#allocation2] sm:$0xf]
    %v25 = vld [vmem:[%s1] sm:$0x3]
    %v27 = vlaneseq
    %v28 = vshrl.u32 %v27, 7
    %v29 = vsub.s32 0, %v28
    %v30 = vrot.slane %v25, %v29
    %v31 = vlaneseq
    %v32 = vshrl.u32 %v31, 7
    %v33 = vsub.s32 1, %v32
    %v34 = vrot.slane %v25, %v33
    %v35 = vcombine.low %v30, %v34
    %v37 = vunpack.c.l.s4 1983009808
    %v38 = vunpack.c.0.s8 %v37
    %v39 = vlaneseq
    %v40 = vshrl.u32 %v39, 7
    %v41 = vsub.s32 %v38, %v40
    %v42 = vrot.slane %v35, %v41
    %v44 = vadd.f32 %v24, %v42
    %45 = vst [vmem:[#allocation5] sm:$0xf] %v44
    // Predicated region
    $region14: #{tpu_custom_call.1} parent=1 // pred_check
      _
    $region15: #{tpu_custom_call.1} parent=1 // pred_check_branch
      %47 = sbr.rel (0) target = $region17
    $region16: #{tpu_custom_call.1} parent=1 // pred_region
      %s49 = ssub.s32 64, 64
      %50 = vsyncadd [#allocation4], %s49
      %s52 = sshll.u32 [#allocation5], 4
      %s53 = int_to_ptr.vmem [resolvable:$true] %s52
      %55 = dma.vmem_to_hbm [thread:$0]  %s53, 64, %s2, [#allocation4]
    $region17: #{tpu_custom_call.1} parent=1 // pred_fallthru
      _
    // Predicated region
    $region18: #{tpu_custom_call.1} parent=1 // pred_check
      _
    $region19: #{tpu_custom_call.1} parent=1 // pred_check_branch
      %57 = sbr.rel (0) target = $region21
    $region20: #{tpu_custom_call.1} parent=1 // pred_region
      %58 = dma.done [#allocation4], 64
    $region21: #{tpu_custom_call.1} parent=1 // pred_fallthru
      _
    %59 = vsyncpa [#allocation3], 1
    %60 = vsyncpa [#allocation4], 1

</llo_original>
